<compile_context>
chip_gen: v7x
topology: tpu7x:2x2x1
jax: 0.10.0
libtpu: 0.0.40
codegen_flags: <defaults>
</compile_context>

<pallas_src>
import functools

import jax
import jax.numpy as jnp
from jax.experimental import pallas as pl
from jax.experimental.pallas import tpu as pltpu


def _temporal_attention_kernel(x_ref, w1_ref, b1_ref, w2b_ref, w2s_ref, b2_ref,
                               out_ref, attn_ref):
    # x_ref:    (tm, P*H)    packed input rows (P logical rows per packed row)
    # w1_ref:   (P*H, P*H4)  block-diagonal first linear weight (VMEM resident)
    # b1_ref:   (1, P*H4)    tiled first linear bias
    # w2b_ref:  (P*H4, P*H)  block-diag second weight, replicated across each H-lane group
    # w2s_ref:  (P*H4, P)    block-diag second weight (compact, for the attn output)
    # b2_ref:   (1,) SMEM    second linear bias scalar
    # out_ref:  (tm, P*H)    x * attention (packed like x)
    # attn_ref: (tm, P)      attention weights (P logical rows per packed row)
    x = x_ref[...].astype(jnp.float32)

    # Linear(H -> H//4) + ReLU, applied block-wise to the P packed rows.
    h = jnp.dot(x, w1_ref[...], preferred_element_type=jnp.float32) + b1_ref[...]
    h = jnp.maximum(h, 0.0)

    b2 = b2_ref[0]

    # Second linear + sigmoid.  w2b replicates each row's scalar across its
    # H-lane group, so the attention arrives lane-dense and already broadcast:
    # the x * a multiply below is a plain full-lane VPU op (no relayout).
    a_full = jax.nn.sigmoid(
        jnp.dot(h, w2b_ref[...], preferred_element_type=jnp.float32) + b2)
    # Compact per-row attention for the second output.
    a_small = jax.nn.sigmoid(
        jnp.dot(h, w2s_ref[...], preferred_element_type=jnp.float32) + b2)

    out_ref[...] = (x * a_full).astype(out_ref.dtype)
    attn_ref[...] = a_small.astype(attn_ref.dtype)


@functools.partial(jax.jit, static_argnames=("tm",))
def temporal_attention(x, w1, b1, w2, b2, *, tm=4096):
    """x: (B, S, H). w1: (H, H//4), b1: (H//4,), w2: (H//4, 1), b2: (1,).

    Returns (attended (B, S, H), attention (B, S, 1)).
    `tm` is the tile size in *packed* rows (each packed row holds P logical rows).
    """
    B, S, H = x.shape
    H4 = w1.shape[1]
    N = B * S

    # Lane-packing factor: P logical rows per 128-lane packed row when H | 128.
    # Reduce P (power of 2) until it divides N so the packing reshape is free.
    P = (128 // H) if (H <= 128 and 128 % H == 0) else 1
    while P > 1 and N % P:
        P //= 2
    PH, PH4 = P * H, P * H4
    Np = N // P                                   # packed row count (exact)

    # Tile size: the biggest that fits a conservative VMEM budget (v7x has only
    # 64 MiB physical / 32 MiB scoped default).  Budget covers double-buffered
    # in/out tiles plus the f32 intermediates (x, h, a_full, result).
    itemsize = jnp.dtype(x.dtype).itemsize
    io_row = max(PH, 128) * itemsize              # lane-padded io bytes per row
    f32_row = max(PH, 128) * 4
    budget_rows = (24 * 1024 * 1024) // (4 * io_row + 4 * f32_row)
    tm_cap = max(8, min(tm, budget_rows) // 8 * 8)

    xp = x.reshape(Np, PH)                        # free reshape (contiguous rows)
    if Np >= 8:
        # No padding copy: the partial last grid block is handled by Pallas
        # (OOB input rows are garbage, OOB output rows are dropped), which
        # avoids an extra full read+write of x on a bandwidth-bound op.
        tm_eff = min(tm_cap, (Np // 8) * 8)
        Np_arr = Np
    else:
        # Tiny input: pad packed rows up to one (8, PH) block.
        tm_eff = 8
        Np_arr = 8
        xp = jnp.pad(xp, ((0, Np_arr - Np), (0, 0)))
    grid = (pl.cdiv(Np_arr, tm_eff),)

    # Host-side packed weights (tiny, block-diagonal so K fills all 128 lanes).
    f32 = jnp.float32
    w1f = w1.astype(f32)
    w2f = w2.reshape(H4, 1).astype(f32)
    eye_p = jnp.eye(P, dtype=f32)
    w1p = jnp.kron(eye_p, w1f)                                      # (PH, PH4)
    b1p = jnp.tile(b1.reshape(1, H4).astype(f32), (1, P))           # (1, PH4)
    w2b = jnp.kron(eye_p, jnp.broadcast_to(w2f, (H4, H)))           # (PH4, PH)
    w2s = jnp.kron(eye_p, w2f)                                      # (PH4, P)
    b2s = jnp.asarray(b2, f32).reshape(1)                           # SMEM scalar

    outp, attnp = pl.pallas_call(
        _temporal_attention_kernel,
        out_shape=(
            jax.ShapeDtypeStruct((Np_arr, PH), x.dtype),
            jax.ShapeDtypeStruct((Np_arr, P), x.dtype),
        ),
        grid_spec=pltpu.PrefetchScalarGridSpec(
            num_scalar_prefetch=0,
            grid=grid,
            in_specs=[
                pl.BlockSpec((tm_eff, PH), lambda i: (i, 0)),        # packed x rows
                pl.BlockSpec((PH, PH4), lambda i: (0, 0)),           # W1 (block-diag, VMEM resident)
                pl.BlockSpec((1, PH4), lambda i: (0, 0)),            # b1 (tiled)
                pl.BlockSpec((PH4, PH), lambda i: (0, 0)),           # W2 (broadcast form)
                pl.BlockSpec((PH4, P), lambda i: (0, 0)),            # W2 (compact form)
                pl.BlockSpec(memory_space=pltpu.MemorySpace.SMEM),   # b2 scalar
            ],
            out_specs=[
                pl.BlockSpec((tm_eff, PH), lambda i: (i, 0)),
                pl.BlockSpec((tm_eff, P), lambda i: (i, 0)),
            ],
        ),
        compiler_params=pltpu.CompilerParams(
            dimension_semantics=("parallel",)),
    )(xp, w1p, b1p, w2b, w2s, b2s)

    out = outp.reshape(Np_arr * P, H)[:N].reshape(B, S, H)
    attn = attnp.reshape(Np_arr * P, 1)[:N].reshape(B, S, 1)
    return out, attn


def reference(x, w1, b1, w2, b2):
    h = jnp.maximum(x @ w1 + b1, 0.0)
    a = jax.nn.sigmoid(h @ w2 + b2)
    return x * a, a


if __name__ == "__main__":
    key = jax.random.PRNGKey(0)
    kx, k1, k2, k3, k4, kx2 = jax.random.split(key, 6)

    B, S, H = 2, 8, 32
    H4 = H // 4

    x = jax.random.normal(kx, (B, S, H), dtype=jnp.float32)
    # Parameters from nn.Linear(H, H//4) and nn.Linear(H//4, 1), stored as
    # (in, out) so the kernel computes x @ W directly.
    w1 = jax.random.normal(k1, (H, H4), dtype=jnp.float32) * 0.1
    b1 = jax.random.normal(k2, (H4,), dtype=jnp.float32) * 0.1
    w2 = jax.random.normal(k3, (H4, 1), dtype=jnp.float32) * 0.1
    b2 = jax.random.normal(k4, (1,), dtype=jnp.float32) * 0.1

    out, attn = temporal_attention(x, w1, b1, w2, b2)
    jax.block_until_ready((out, attn))
    ref_out, ref_attn = reference(x, w1, b1, w2, b2)
    assert out.shape == (B, S, H) and attn.shape == (B, S, 1)
    assert jnp.allclose(out, ref_out, atol=1e-5, rtol=1e-5), "attended output mismatch"
    assert jnp.allclose(attn, ref_attn, atol=1e-5, rtol=1e-5), "attention weights mismatch"

    # Second shape exercising the multi-tile / partial-last-block (no-pad) path.
    B2, S2 = 4, 500
    x2 = jax.random.normal(kx2, (B2, S2, H), dtype=jnp.float32)
    out2, attn2 = temporal_attention(x2, w1, b1, w2, b2)
    jax.block_until_ready((out2, attn2))
    ref_out2, ref_attn2 = reference(x2, w1, b1, w2, b2)
    assert out2.shape == (B2, S2, H) and attn2.shape == (B2, S2, 1)
    assert jnp.allclose(out2, ref_out2, atol=1e-5, rtol=1e-5), "attended output mismatch (large)"
    assert jnp.allclose(attn2, ref_attn2, atol=1e-5, rtol=1e-5), "attention weights mismatch (large)"

    print("KERNEL_OK")
</pallas_src>

<mosaic_0001>
module attributes {stable_mosaic.version = 11 : i64} {
  func.func @_temporal_attention_kernel(%arg0: i32, %arg1: memref<8x128xf32, #tpu.memory_space<vmem>>, %arg2: memref<128x32xf32, #tpu.memory_space<vmem>>, %arg3: memref<1x32xf32, #tpu.memory_space<vmem>>, %arg4: memref<32x128xf32, #tpu.memory_space<vmem>>, %arg5: memref<32x4xf32, #tpu.memory_space<vmem>>, %arg6: memref<1xf32, #tpu.memory_space<smem>>, %arg7: memref<8x128xf32, #tpu.memory_space<vmem>>, %arg8: memref<8x4xf32, #tpu.memory_space<vmem>>) attributes {dimension_semantics = [#tpu.dimension_semantics<parallel>], iteration_bounds = array<i64: 1>, scalar_prefetch = 0 : i64, scratch_operands = 0 : i64, tpu.core_type = #tpu.core_type<tc>, window_params = [{transform_indices = @transform_0, window_bounds = array<i64: 8, 128>}, {pipeline_mode = #tpu.pipeline_mode<synchronous>, transform_indices = @transform_1, window_bounds = array<i64: 128, 32>}, {pipeline_mode = #tpu.pipeline_mode<synchronous>, transform_indices = @transform_2, window_bounds = array<i64: 1, 32>}, {pipeline_mode = #tpu.pipeline_mode<synchronous>, transform_indices = @transform_3, window_bounds = array<i64: 32, 128>}, {pipeline_mode = #tpu.pipeline_mode<synchronous>, transform_indices = @transform_4, window_bounds = array<i64: 32, 4>}, {transform_indices = @transform_5, window_bounds = array<i64: 1>}, {transform_indices = @transform_6, window_bounds = array<i64: 8, 128>}, {transform_indices = @transform_7, window_bounds = array<i64: 8, 4>}]} {
    %c0 = arith.constant 0 : index
    %c0_0 = arith.constant 0 : index
    %0 = vector.load %arg1[%c0, %c0_0] : memref<8x128xf32, #tpu.memory_space<vmem>>, vector<8x128xf32>
    %c0_1 = arith.constant 0 : index
    %c0_2 = arith.constant 0 : index
    %1 = vector.load %arg2[%c0_1, %c0_2] : memref<128x32xf32, #tpu.memory_space<vmem>>, vector<128x32xf32>
    %cst = arith.constant dense<0.000000e+00> : vector<8x32xf32>
    %2 = tpu.matmul %0, %1, %cst {dimension_numbers = #tpu.dot_dimension_numbers<[1], [0], [0], [1], [0, 0, 1, 1], [], []>} : vector<8x128xf32>, vector<128x32xf32>, vector<8x32xf32> -> vector<8x32xf32>
    %c0_3 = arith.constant 0 : index
    %c0_4 = arith.constant 0 : index
    %3 = vector.load %arg3[%c0_3, %c0_4] : memref<1x32xf32, #tpu.memory_space<vmem>>, vector<1x32xf32>
    %4 = vector.broadcast %3 : vector<1x32xf32> to vector<8x32xf32>
    %5 = arith.addf %2, %4 : vector<8x32xf32>
    %cst_5 = arith.constant 0.000000e+00 : f32
    %6 = vector.broadcast %cst_5 : f32 to vector<8x32xf32>
    %7 = arith.maximumf %5, %6 : vector<8x32xf32>
    %c0_6 = arith.constant 0 : index
    %8 = memref.load %arg6[%c0_6] : memref<1xf32, #tpu.memory_space<smem>>
    %c0_7 = arith.constant 0 : index
    %c0_8 = arith.constant 0 : index
    %9 = vector.load %arg4[%c0_7, %c0_8] : memref<32x128xf32, #tpu.memory_space<vmem>>, vector<32x128xf32>
    %cst_9 = arith.constant dense<0.000000e+00> : vector<8x128xf32>
    %10 = tpu.matmul %7, %9, %cst_9 {dimension_numbers = #tpu.dot_dimension_numbers<[1], [0], [0], [1], [0, 0, 1, 1], [], []>} : vector<8x32xf32>, vector<32x128xf32>, vector<8x128xf32> -> vector<8x128xf32>
    %11 = vector.broadcast %8 : f32 to vector<8x128xf32>
    %12 = arith.addf %10, %11 : vector<8x128xf32>
    %13 = arith.negf %12 : vector<8x128xf32>
    %14 = math.exp %13 : vector<8x128xf32>
    %cst_10 = arith.constant 1.000000e+00 : f32
    %15 = vector.broadcast %cst_10 : f32 to vector<8x128xf32>
    %16 = arith.addf %15, %14 : vector<8x128xf32>
    %17 = arith.divf %15, %16 : vector<8x128xf32>
    %c0_11 = arith.constant 0 : index
    %c0_12 = arith.constant 0 : index
    %18 = vector.load %arg5[%c0_11, %c0_12] : memref<32x4xf32, #tpu.memory_space<vmem>>, vector<32x4xf32>
    %cst_13 = arith.constant dense<0.000000e+00> : vector<8x4xf32>
    %19 = tpu.matmul %7, %18, %cst_13 {dimension_numbers = #tpu.dot_dimension_numbers<[1], [0], [0], [1], [0, 0, 1, 1], [], []>} : vector<8x32xf32>, vector<32x4xf32>, vector<8x4xf32> -> vector<8x4xf32>
    %20 = vector.broadcast %8 : f32 to vector<8x4xf32>
    %21 = arith.addf %19, %20 : vector<8x4xf32>
    %22 = arith.negf %21 : vector<8x4xf32>
    %23 = math.exp %22 : vector<8x4xf32>
    %cst_14 = arith.constant 1.000000e+00 : f32
    %24 = vector.broadcast %cst_14 : f32 to vector<8x4xf32>
    %25 = arith.addf %24, %23 : vector<8x4xf32>
    %26 = arith.divf %24, %25 : vector<8x4xf32>
    %27 = arith.mulf %0, %17 : vector<8x128xf32>
    %c0_15 = arith.constant 0 : index
    %c0_16 = arith.constant 0 : index
    %28 = vector.load %arg7[%c0_15, %c0_16] : memref<8x128xf32, #tpu.memory_space<vmem>>, vector<8x128xf32>
    tpu.vector_store %arg7[%c0_15, %c0_16], %27 {strides = array<i32>} : memref<8x128xf32, #tpu.memory_space<vmem>>, vector<8x128xf32>,
    %c0_17 = arith.constant 0 : index
    %c0_18 = arith.constant 0 : index
    %29 = vector.load %arg8[%c0_17, %c0_18] : memref<8x4xf32, #tpu.memory_space<vmem>>, vector<8x4xf32>
    tpu.vector_store %arg8[%c0_17, %c0_18], %26 {strides = array<i32>} : memref<8x4xf32, #tpu.memory_space<vmem>>, vector<8x4xf32>,
    return
  }
  func.func @transform_0(%arg0: i32) -> (i32, i32) {
    %c0_i32 = arith.constant 0 : i32
    %c0_i32_0 = arith.constant 0 : i32
    return %arg0, %c0_i32 : i32, i32
  }
  func.func @transform_1(%arg0: i32) -> (i32, i32) {
    %c0_i32 = arith.constant 0 : i32
    %c0_i32_0 = arith.constant 0 : i32
    %c0_i32_1 = arith.constant 0 : i32
    return %c0_i32, %c0_i32_0 : i32, i32
  }
  func.func @transform_2(%arg0: i32) -> (i32, i32) {
    %c0_i32 = arith.constant 0 : i32
    %c0_i32_0 = arith.constant 0 : i32
    %c0_i32_1 = arith.constant 0 : i32
    return %c0_i32, %c0_i32_0 : i32, i32
  }
  func.func @transform_3(%arg0: i32) -> (i32, i32) {
    %c0_i32 = arith.constant 0 : i32
    %c0_i32_0 = arith.constant 0 : i32
    %c0_i32_1 = arith.constant 0 : i32
    return %c0_i32, %c0_i32_0 : i32, i32
  }
  func.func @transform_4(%arg0: i32) -> (i32, i32) {
    %c0_i32 = arith.constant 0 : i32
    %c0_i32_0 = arith.constant 0 : i32
    %c0_i32_1 = arith.constant 0 : i32
    return %c0_i32, %c0_i32_0 : i32, i32
  }
  func.func @transform_5(%arg0: i32) -> i32 {
    %c0_i32 = arith.constant 0 : i32
    %c0_i32_0 = arith.constant 0 : i32
    return %c0_i32 : i32
  }
  func.func @transform_6(%arg0: i32) -> (i32, i32) {
    %c0_i32 = arith.constant 0 : i32
    %c0_i32_0 = arith.constant 0 : i32
    return %arg0, %c0_i32 : i32, i32
  }
  func.func @transform_7(%arg0: i32) -> (i32, i32) {
    %c0_i32 = arith.constant 0 : i32
    %c0_i32_0 = arith.constant 0 : i32
    return %arg0, %c0_i32 : i32, i32
  }
}

</mosaic_0001>

<llo_original>
// kernel: temporal_attention.1
$region0: #{temporal_attention.1}
  #allocation0 [shape = 'u32[]', space=smem, size = 0x4, offset = 0x4, fixed_abs, tag = 'smem constant byte address 0x4 - core index']
  #allocation1 [shape = 'u32[144,128]{1,0:T(1,128)}', space=vmem, size = 0x12000, scoped, tag = 'internal scratch']
  #allocation2 [shape = 'f32[1]{0:T(128)S(6)}', space=smem, size = 0x200, scoped, tag = 'scoped memory for temporal_attention.1']
  %s0 = inlined_call_operand.vmem [shape: f32[8,128], index: 0, kind: input, shape index: {}]
  %s1 = inlined_call_operand.vmem [shape: f32[128,32], index: 1, kind: input, shape index: {}]
  %s2 = inlined_call_operand.vmem [shape: f32[1,32], index: 2, kind: input, shape index: {}]
  %s3 = inlined_call_operand.vmem [shape: f32[32,128], index: 3, kind: input, shape index: {}]
  %s4 = inlined_call_operand.vmem [shape: f32[32,4], index: 4, kind: input, shape index: {}]
  %s5 = inlined_call_operand.<no memory space> [shape: f32[1], index: 5, kind: input, shape index: {}]
  %s6 = inlined_call_operand.vmem [shape: f32[8,128], index: 6, kind: output, shape index: {0}]
  %s7 = inlined_call_operand.vmem [shape: f32[8,4], index: 7, kind: output, shape index: {1}]
  %8 = xla_tuple %s6, %s7
  %s9 = sld [smem:[#allocation0]]
  $region42: #{temporal_attention.1} parent=0
    _
  %s11 = ssub.s32 1, %s9
  %s12 = scalar_select 0, %s11, %s9
  %13 = sst [smem:[#allocation2]] %s5
  // Predicated region
  $region2: #{temporal_attention.1} parent=0 // pred_check
    _
  $region3: #{temporal_attention.1} parent=0 // pred_check_branch
    %15 = sbr.rel (0) target = $region5
  $region4: #{temporal_attention.1} parent=0 // pred_region
    _
  $region5: #{temporal_attention.1} parent=0 // pred_fallthru
    _
  // Predicated region
  $region6: #{temporal_attention.1} parent=0 // pred_check
    _
  $region7: #{temporal_attention.1} parent=0 // pred_check_branch
    %17 = sbr.rel (0) target = $region9
  $region8: #{temporal_attention.1} parent=0 // pred_region
    _
  $region9: #{temporal_attention.1} parent=0 // pred_fallthru
    _
  // Predicated region
  $region10: #{temporal_attention.1} parent=0 // pred_check
    _
  $region11: #{temporal_attention.1} parent=0 // pred_check_branch
    %19 = sbr.rel (0) target = $region13
  $region12: #{temporal_attention.1} parent=0 // pred_region
    _
  $region13: #{temporal_attention.1} parent=0 // pred_fallthru
    _
  // Predicated region
  $region14: #{temporal_attention.1} parent=0 // pred_check
    _
  $region15: #{temporal_attention.1} parent=0 // pred_check_branch
    %21 = sbr.rel (0) target = $region17
  $region16: #{temporal_attention.1} parent=0 // pred_region
    _
  $region17: #{temporal_attention.1} parent=0 // pred_fallthru
    _
  // Predicated region
  $region18: #{temporal_attention.1} parent=0 // pred_check
    _
  $region19: #{temporal_attention.1} parent=0 // pred_check_branch
    %23 = sbr.rel (0) target = $region21
  $region20: #{temporal_attention.1} parent=0 // pred_region
    _
  $region21: #{temporal_attention.1} parent=0 // pred_fallthru
    _
  // Predicated region
  $region22: #{temporal_attention.1} parent=0 // pred_check
    _
  $region23: #{temporal_attention.1} parent=0 // pred_check_branch
    %25 = sbr.rel (0) target = $region25
  $region24: #{temporal_attention.1} parent=0 // pred_region
    _
  $region25: #{temporal_attention.1} parent=0 // pred_fallthru
    _
  %v26 = vld [vmem:[%s0] sm:$0xff]
  %v27 = vld [vmem:[%s1] sm:$0xff]
  %v28 = vld [vmem:[%s1 + $0x8] sm:$0xff]
  %v29 = vld [vmem:[%s1 + $0x10] sm:$0xff]
  %v30 = vld [vmem:[%s1 + $0x18] sm:$0xff]
  %v31 = vld [vmem:[%s1 + $0x20] sm:$0xff]
  %v32 = vld [vmem:[%s1 + $0x28] sm:$0xff]
  %v33 = vld [vmem:[%s1 + $0x30] sm:$0xff]
  %v34 = vld [vmem:[%s1 + $0x38] sm:$0xff]
  %v35 = vld [vmem:[%s1 + $0x40] sm:$0xff]
  %v36 = vld [vmem:[%s1 + $0x48] sm:$0xff]
  %v37 = vld [vmem:[%s1 + $0x50] sm:$0xff]
  %v38 = vld [vmem:[%s1 + $0x58] sm:$0xff]
  %v39 = vld [vmem:[%s1 + $0x60] sm:$0xff]
  %v40 = vld [vmem:[%s1 + $0x68] sm:$0xff]
  %v41 = vld [vmem:[%s1 + $0x70] sm:$0xff]
  %v42 = vld [vmem:[%s1 + $0x78] sm:$0xff]
  %v43 = vld [vmem:[%s2] sm:$0x1]
  %v45 = vlaneseq
  %v46 = vshrl.u32 %v45, 7
  %v47 = vsub.s32 0, %v46
  %v48 = vrot.slane %v43, %v47
  %50 = vmatprep.subr.mxu0 0.0
  %51 = vmatpush1.msra.mxu0 %v27
  %52 = vmatprep.subr.mxu0 0.0
  %53 = vmatpush1.msra.mxu0 %v28
  %54 = vmatprep.subr.mxu0 0.0
  %55 = vmatpush1.msra.mxu0 %v29
  %56 = vmatprep.subr.mxu0 0.0
  %57 = vmatpush1.msra.mxu0 %v30
  %58 = vmatprep.subr.mxu0 0.0
  %59 = vmatpush1.msra.mxu0 %v31
  %60 = vmatprep.subr.mxu0 0.0
  %61 = vmatpush1.msra.mxu0 %v32
  %62 = vmatprep.subr.mxu0 0.0
  %63 = vmatpush1.msra.mxu0 %v33
  %64 = vmatprep.subr.mxu0 0.0
  %65 = vmatpush1.msra.mxu0 %v34
  %66 = vmatprep.subr.mxu0 0.0
  %67 = vmatpush1.msra.mxu0 %v35
  %68 = vmatprep.subr.mxu0 0.0
  %69 = vmatpush1.msra.mxu0 %v36
  %70 = vmatprep.subr.mxu0 0.0
  %71 = vmatpush1.msra.mxu0 %v37
  %72 = vmatprep.subr.mxu0 0.0
  %73 = vmatpush1.msra.mxu0 %v38
  %74 = vmatprep.subr.mxu0 0.0
  %75 = vmatpush1.msra.mxu0 %v39
  %76 = vmatprep.subr.mxu0 0.0
  %77 = vmatpush1.msra.mxu0 %v40
  %78 = vmatprep.subr.mxu0 0.0
  %79 = vmatpush1.msra.mxu0 %v41
  %80 = vmatprep.subr.mxu0 0.0
  %81 = vmatpush1.msra.mxu0 %v42
  %82 = vmatprep.subr.mxu0 0.0
  %83 = vmatpush1.msra.mxu0 0.0
  %84 = vmatprep.subr.mxu0 0.0
  %85 = vmatpush1.msra.mxu0 0.0
  %86 = vmatprep.subr.mxu0 0.0
  %87 = vmatpush1.msra.mxu0 0.0
  %88 = vmatprep.subr.mxu0 0.0
  %89 = vmatpush1.msra.mxu0 0.0
  %90 = vmatprep.subr.mxu0 0.0
  %91 = vmatpush1.msra.mxu0 0.0
  %92 = vmatprep.subr.mxu0 0.0
  %93 = vmatpush1.msra.mxu0 0.0
  %94 = vmatprep.subr.mxu0 0.0
  %95 = vmatpush1.msra.mxu0 0.0
  %96 = vmatprep.subr.mxu0 0.0
  %97 = vmatpush1.msra.mxu0 0.0
  %98 = vmatprep.subr.mxu0 0.0
  %99 = vmatpush1.msra.mxu0 0.0
  %100 = vmatprep.subr.mxu0 0.0
  %101 = vmatpush1.msra.mxu0 0.0
  %102 = vmatprep.subr.mxu0 0.0
  %103 = vmatpush1.msra.mxu0 0.0
  %104 = vmatprep.subr.mxu0 0.0
  %105 = vmatpush1.msra.mxu0 0.0
  %106 = vmatprep.subr.mxu0 0.0
  %107 = vmatpush1.msra.mxu0 0.0
  %108 = vmatprep.subr.mxu0 0.0
  %109 = vmatpush1.msra.mxu0 0.0
  %110 = vmatprep.subr.mxu0 0.0
  %111 = vmatpush1.msra.mxu0 0.0
  %112 = vmatprep.subr.mxu0 0.0
  %113 = vmatpush1.msra.mxu0 0.0
  %114 = vmatprep.mubr.f32.mxu0 0.0
  %115 = vmatmul.mubr.f32.gmra.mrb[0].mxu0 %v26
  %v116 = vpop.f32.mrb[0].mxu0
  %v117 = vadd.f32 %v48, %v116
  %v118 = vpop.f32.mrb[0].mxu0
  %119 = vdwg.mxu0
  %v120 = vmax.f32 %v117, 0.0
  %s121 = sld [smem:[#allocation2]]
  %v122 = vld [vmem:[%s3] sm:$0xff]
  %v123 = vld [vmem:[%s3 + $0x8] sm:$0xff]
  %v124 = vld [vmem:[%s3 + $0x10] sm:$0xff]
  %v125 = vld [vmem:[%s3 + $0x18] sm:$0xff]
  %v126 = vstv %s121
  %vm127 = vcmask 261120
  %v129 = vsel %vm127, %v120, 0
  %131 = vmatprep.subr.mxu0 0.0
  %132 = vmatpush1.msra.mxu0 %v122
  %133 = vmatprep.subr.mxu0 0.0
  %134 = vmatpush1.msra.mxu0 %v123
  %135 = vmatprep.subr.mxu0 0.0
  %136 = vmatpush1.msra.mxu0 %v124
  %137 = vmatprep.subr.mxu0 0.0
  %138 = vmatpush1.msra.mxu0 %v125
  %139 = vmatprep.subr.mxu0 0.0
  %140 = vmatpush1.msra.mxu0 0.0
  %141 = vmatprep.subr.mxu0 0.0
  %142 = vmatpush1.msra.mxu0 0.0
  %143 = vmatprep.subr.mxu0 0.0
  %144 = vmatpush1.msra.mxu0 0.0
  %145 = vmatprep.subr.mxu0 0.0
  %146 = vmatpush1.msra.mxu0 0.0
  %147 = vmatprep.subr.mxu0 0.0
  %148 = vmatpush1.msra.mxu0 0.0
  %149 = vmatprep.subr.mxu0 0.0
  %150 = vmatpush1.msra.mxu0 0.0
  %151 = vmatprep.subr.mxu0 0.0
  %152 = vmatpush1.msra.mxu0 0.0
  %153 = vmatprep.subr.mxu0 0.0
  %154 = vmatpush1.msra.mxu0 0.0
  %155 = vmatprep.subr.mxu0 0.0
  %156 = vmatpush1.msra.mxu0 0.0
  %157 = vmatprep.subr.mxu0 0.0
  %158 = vmatpush1.msra.mxu0 0.0
  %159 = vmatprep.subr.mxu0 0.0
  %160 = vmatpush1.msra.mxu0 0.0
  %161 = vmatprep.subr.mxu0 0.0
  %162 = vmatpush1.msra.mxu0 0.0
  %163 = vmatprep.subr.mxu0 0.0
  %164 = vmatpush1.msra.mxu0 0.0
  %165 = vmatprep.subr.mxu0 0.0
  %166 = vmatpush1.msra.mxu0 0.0
  %167 = vmatprep.subr.mxu0 0.0
  %168 = vmatpush1.msra.mxu0 0.0
  %169 = vmatprep.subr.mxu0 0.0
  %170 = vmatpush1.msra.mxu0 0.0
  %171 = vmatprep.subr.mxu0 0.0
  %172 = vmatpush1.msra.mxu0 0.0
  %173 = vmatprep.subr.mxu0 0.0
  %174 = vmatpush1.msra.mxu0 0.0
  %175 = vmatprep.subr.mxu0 0.0
  %176 = vmatpush1.msra.mxu0 0.0
  %177 = vmatprep.subr.mxu0 0.0
  %178 = vmatpush1.msra.mxu0 0.0
  %179 = vmatprep.subr.mxu0 0.0
  %180 = vmatpush1.msra.mxu0 0.0
  %181 = vmatprep.subr.mxu0 0.0
  %182 = vmatpush1.msra.mxu0 0.0
  %183 = vmatprep.subr.mxu0 0.0
  %184 = vmatpush1.msra.mxu0 0.0
  %185 = vmatprep.subr.mxu0 0.0
  %186 = vmatpush1.msra.mxu0 0.0
  %187 = vmatprep.subr.mxu0 0.0
  %188 = vmatpush1.msra.mxu0 0.0
  %189 = vmatprep.subr.mxu0 0.0
  %190 = vmatpush1.msra.mxu0 0.0
  %191 = vmatprep.subr.mxu0 0.0
  %192 = vmatpush1.msra.mxu0 0.0
  %193 = vmatprep.subr.mxu0 0.0
  %194 = vmatpush1.msra.mxu0 0.0
  %195 = vmatprep.mubr.f32.mxu0 0.0
  %196 = vmatmul.mubr.f32.gmra.mrb[0].mxu0 %v129
  %v197 = vpop.f32.mrb[0].mxu0
  %v198 = vadd.f32 %v126, %v197
  %v199 = vpop.f32.mrb[0].mxu0
  %200 = vdwg.mxu0
  %v201 = vxor.u32 %v198, 2147483648
  %v202 = vmul.f32 %v201, 1.442695
  %v203 = vpow.pop %v202
  %v204 = vadd.f32 %v203, 1.0
  %v205 = vrcp.pop %v204
  %v206 = vmul.f32 1.0, %v205
  %v207 = vld [vmem:[%s4] sm:$0xff]
  %v208 = vld [vmem:[%s4 + $0x8] sm:$0xff]
  %v209 = vld [vmem:[%s4 + $0x10] sm:$0xff]
  %v210 = vld [vmem:[%s4 + $0x18] sm:$0xff]
  %211 = vmatprep.subr.mxu0 0.0
  %212 = vmatpush1.msra.mxu0 %v207
  %213 = vmatprep.subr.mxu0 0.0
  %214 = vmatpush1.msra.mxu0 %v208
  %215 = vmatprep.subr.mxu0 0.0
  %216 = vmatpush1.msra.mxu0 %v209
  %217 = vmatprep.subr.mxu0 0.0
  %218 = vmatpush1.msra.mxu0 %v210
  %219 = vmatprep.subr.mxu0 0.0
  %220 = vmatpush1.msra.mxu0 0.0
  %221 = vmatprep.subr.mxu0 0.0
  %222 = vmatpush1.msra.mxu0 0.0
  %223 = vmatprep.subr.mxu0 0.0
  %224 = vmatpush1.msra.mxu0 0.0
  %225 = vmatprep.subr.mxu0 0.0
  %226 = vmatpush1.msra.mxu0 0.0
  %227 = vmatprep.subr.mxu0 0.0
  %228 = vmatpush1.msra.mxu0 0.0
  %229 = vmatprep.subr.mxu0 0.0
  %230 = vmatpush1.msra.mxu0 0.0
  %231 = vmatprep.subr.mxu0 0.0
  %232 = vmatpush1.msra.mxu0 0.0
  %233 = vmatprep.subr.mxu0 0.0
  %234 = vmatpush1.msra.mxu0 0.0
  %235 = vmatprep.subr.mxu0 0.0
  %236 = vmatpush1.msra.mxu0 0.0
  %237 = vmatprep.subr.mxu0 0.0
  %238 = vmatpush1.msra.mxu0 0.0
  %239 = vmatprep.subr.mxu0 0.0
  %240 = vmatpush1.msra.mxu0 0.0
  %241 = vmatprep.subr.mxu0 0.0
  %242 = vmatpush1.msra.mxu0 0.0
  %243 = vmatprep.subr.mxu0 0.0
  %244 = vmatpush1.msra.mxu0 0.0
  %245 = vmatprep.subr.mxu0 0.0
  %246 = vmatpush1.msra.mxu0 0.0
  %247 = vmatprep.subr.mxu0 0.0
  %248 = vmatpush1.msra.mxu0 0.0
  %249 = vmatprep.subr.mxu0 0.0
  %250 = vmatpush1.msra.mxu0 0.0
  %251 = vmatprep.subr.mxu0 0.0
  %252 = vmatpush1.msra.mxu0 0.0
  %253 = vmatprep.subr.mxu0 0.0
  %254 = vmatpush1.msra.mxu0 0.0
  %255 = vmatprep.subr.mxu0 0.0
  %256 = vmatpush1.msra.mxu0 0.0
  %257 = vmatprep.subr.mxu0 0.0
  %258 = vmatpush1.msra.mxu0 0.0
  %259 = vmatprep.subr.mxu0 0.0
  %260 = vmatpush1.msra.mxu0 0.0
  %261 = vmatprep.subr.mxu0 0.0
  %262 = vmatpush1.msra.mxu0 0.0
  %263 = vmatprep.subr.mxu0 0.0
  %264 = vmatpush1.msra.mxu0 0.0
  %265 = vmatprep.subr.mxu0 0.0
  %266 = vmatpush1.msra.mxu0 0.0
  %267 = vmatprep.subr.mxu0 0.0
  %268 = vmatpush1.msra.mxu0 0.0
  %269 = vmatprep.subr.mxu0 0.0
  %270 = vmatpush1.msra.mxu0 0.0
  %271 = vmatprep.subr.mxu0 0.0
  %272 = vmatpush1.msra.mxu0 0.0
  %273 = vmatprep.subr.mxu0 0.0
  %274 = vmatpush1.msra.mxu0 0.0
  %275 = vmatprep.mubr.f32.mxu0 0.0
  %276 = vmatmul.mubr.f32.gmra.mrb[0].mxu0 %v129
  %v277 = vpop.f32.mrb[0].mxu0
  %v278 = vadd.f32 %v126, %v277
  %v279 = vpop.f32.mrb[0].mxu0
  %280 = vdwg.mxu0
  %v281 = vxor.u32 %v278, 2147483648
  %v282 = vmul.f32 %v281, 1.442695
  %v283 = vpow.pop %v282
  %v284 = vadd.f32 %v283, 1.0
  %v285 = vrcp.pop %v284
  %v286 = vmul.f32 1.0, %v285
  %v287 = vmul.f32 %v26, %v206
  %288 = vst [vmem:[%s6] sm:$0xff] %v287
  %vm289 = vcmask 31744
  %290 = vst.msk [vmem:[%s7] sm:$0xff] %vm289, %v286
  // Predicated region
  $region26: #{temporal_attention.1} parent=0 // pred_check
    _
  $region27: #{temporal_attention.1} parent=0 // pred_check_branch
    %292 = sbr.rel (0) target = $region29
  $region28: #{temporal_attention.1} parent=0 // pred_region
    _
  $region29: #{temporal_attention.1} parent=0 // pred_fallthru
    _
  // Predicated region
  $region30: #{temporal_attention.1} parent=0 // pred_check
    _
  $region31: #{temporal_attention.1} parent=0 // pred_check_branch
    %294 = sbr.rel (0) target = $region33
  $region32: #{temporal_attention.1} parent=0 // pred_region
    _
  $region33: #{temporal_attention.1} parent=0 // pred_fallthru
    _
  // Predicated region
  $region34: #{temporal_attention.1} parent=0 // pred_check
    _
  $region35: #{temporal_attention.1} parent=0 // pred_check_branch
    %296 = sbr.rel (0) target = $region37
  $region36: #{temporal_attention.1} parent=0 // pred_region
    _
  $region37: #{temporal_attention.1} parent=0 // pred_fallthru
    _
  // Predicated region
  $region38: #{temporal_attention.1} parent=0 // pred_check
    _
  $region39: #{temporal_attention.1} parent=0 // pred_check_branch
    %298 = sbr.rel (0) target = $region41
  $region40: #{temporal_attention.1} parent=0 // pred_region
    _
  $region41: #{temporal_attention.1} parent=0 // pred_fallthru
    _

</llo_original>
